<compile_context>
chip_gen: v5e
topology: v5e:2x2
jax: 0.10.0
libtpu: 0.0.40
codegen_flags: <defaults>
</compile_context>

<pallas_src>
import numpy as np
import jax
import jax.numpy as jnp
from jax.experimental import pallas as pl
from jax.experimental.pallas import tpu as pltpu

# Module buffer: [5]*9 + [4]*6 + [3]*16 + [2]*8 + [1]*6 + [0]*10  -> length 55
ATTRIBUTION_IDS = np.array([5] * 9 + [4] * 6 + [3] * 16 + [2] * 8 + [1] * 6 + [0] * 10,
                           dtype=np.int32)
SEQ_LEN = ATTRIBUTION_IDS.shape[0]   # 55 (expand() in forward requires seq_len == 55)
D_MODEL = 256

# Batch tile: big enough to amortize grid-step overhead, small enough that a
# double-buffered (TB, 55, 256) int32 output tile (~2 * TB * 56 KB) fits comfortably
# under the scoped-VMEM defaults on every generation (v5e 16 MiB, v6e/v7x 32 MiB).
MAX_BATCH_TILE = 64   # ~7.2 MiB double-buffered at TB=64 — safe everywhere


def attribution_embedding_kernel(ids_ref, out_ref):
    # ids_ref: (seq_len, d_model) int32 in VMEM — already lane-dense (256 lanes),
    #          constant index_map so it stays resident across grid steps.
    # out_ref: (TB, seq_len, d_model) int32 in VMEM (TB batch elements per grid step).
    ids = ids_ref[...]                       # (seq_len, d_model)
    # Rank-2 stores per batch row (avoids a rank-3 broadcast_to / retile in the body).
    for i in range(out_ref.shape[0]):        # TB is static and small (<= 64)
        out_ref[i] = ids


def attribution_embedding(attribution_ids, batch_size, seq_len, d_model):
    """Pallas equivalent of AttributionEmbedding.forward(batch_size, seq_len, device)."""
    assert seq_len == attribution_ids.shape[0], (
        "PyTorch expand() requires seq_len == len(Attribution_ids)")

    # One tiny XLA broadcast (56 KB) in the wrapper: (seq_len,) -> (seq_len, d_model).
    ids_slab = jnp.broadcast_to(
        attribution_ids.astype(jnp.int32)[:, None], (seq_len, d_model))

    # Chunk the batch axis: TB batches per grid step. For batch >= 128 this yields
    # >= 2 "parallel" steps so v7x's two TensorCores each write part of the output;
    # for tiny batches (e.g. B=2) it collapses to a single step, which minimizes
    # grid-step overhead (the dominant cost at this size).
    tb = min(batch_size, MAX_BATCH_TILE)
    grid = (pl.cdiv(batch_size, tb),)

    return pl.pallas_call(
        attribution_embedding_kernel,
        out_shape=jax.ShapeDtypeStruct((batch_size, seq_len, d_model), jnp.int32),
        grid=grid,
        # (55, 256): last two dims = full array dims / multiple of 128 -> valid block.
        in_specs=[pl.BlockSpec((seq_len, d_model), lambda b: (0, 0))],
        # Keep d_model (256) last so every store is an unmasked full-lane vst.
        out_specs=pl.BlockSpec((tb, seq_len, d_model), lambda b: (b, 0, 0)),
        compiler_params=pltpu.CompilerParams(dimension_semantics=("parallel",)),
    )(ids_slab)


if __name__ == "__main__":
    # Deterministic setup (buffer is fixed by the module; key kept for convention).
    key = jax.random.PRNGKey(0)
    del key  # inputs are the fixed registered buffer; nothing random needed

    batch_size = 2
    seq_len = SEQ_LEN       # 55, implied by the forward's expand()
    d_model = D_MODEL       # 256, as in the script

    ids = jnp.asarray(ATTRIBUTION_IDS)
    out = attribution_embedding(ids, batch_size, seq_len, d_model)
    out = jax.block_until_ready(out)

    # Reference semantics check (pure JAX broadcast, mirrors the PyTorch expand chain).
    ref = jnp.broadcast_to(ids[None, :, None], (batch_size, seq_len, d_model)).astype(jnp.int32)
    assert out.shape == (batch_size, seq_len, d_model)
    assert out.dtype == jnp.int32
    np.testing.assert_array_equal(np.asarray(out), np.asarray(ref))

    print("KERNEL_OK")
</pallas_src>

<mosaic_0001>
module attributes {stable_mosaic.version = 11 : i64} {
  func.func @attribution_embedding_kernel(%arg0: i32, %arg1: memref<55x256xi32, #tpu.memory_space<vmem>>, %arg2: memref<2x55x256xi32, #tpu.memory_space<vmem>>) attributes {dimension_semantics = [#tpu.dimension_semantics<parallel>], iteration_bounds = array<i64: 1>, scalar_prefetch = 0 : i64, scratch_operands = 0 : i64, tpu.core_type = #tpu.core_type<tc>, window_params = [{pipeline_mode = #tpu.pipeline_mode<synchronous>, transform_indices = @transform_0, window_bounds = array<i64: 55, 256>}, {transform_indices = @transform_1, window_bounds = array<i64: 2, 55, 256>}]} {
    %c0 = arith.constant 0 : index
    %c0_0 = arith.constant 0 : index
    %0 = vector.load %arg1[%c0, %c0_0] : memref<55x256xi32, #tpu.memory_space<vmem>>, vector<55x256xi32>
    %c0_1 = arith.constant 0 : index
    %c0_2 = arith.constant 0 : index
    %c0_3 = arith.constant 0 : index
    %1 = vector.load %arg2[%c0_1, %c0_2, %c0_3] : memref<2x55x256xi32, #tpu.memory_space<vmem>>, vector<1x55x256xi32>
    %2 = vector.shape_cast %1 : vector<1x55x256xi32> to vector<55x256xi32>
    %3 = vector.shape_cast %0 : vector<55x256xi32> to vector<1x55x256xi32>
    tpu.vector_store %arg2[%c0_1, %c0_2, %c0_3], %3 {strides = array<i32>} : memref<2x55x256xi32, #tpu.memory_space<vmem>>, vector<1x55x256xi32>,
    %c1 = arith.constant 1 : index
    %c0_4 = arith.constant 0 : index
    %c0_5 = arith.constant 0 : index
    %4 = vector.load %arg2[%c1, %c0_4, %c0_5] : memref<2x55x256xi32, #tpu.memory_space<vmem>>, vector<1x55x256xi32>
    %5 = vector.shape_cast %4 : vector<1x55x256xi32> to vector<55x256xi32>
    %6 = vector.shape_cast %0 : vector<55x256xi32> to vector<1x55x256xi32>
    tpu.vector_store %arg2[%c1, %c0_4, %c0_5], %6 {strides = array<i32>} : memref<2x55x256xi32, #tpu.memory_space<vmem>>, vector<1x55x256xi32>,
    return
  }
  func.func @transform_0(%arg0: i32) -> (i32, i32) {
    %c0_i32 = arith.constant 0 : i32
    %c0_i32_0 = arith.constant 0 : i32
    %c0_i32_1 = arith.constant 0 : i32
    return %c0_i32, %c0_i32_0 : i32, i32
  }
  func.func @transform_1(%arg0: i32) -> (i32, i32, i32) {
    %c0_i32 = arith.constant 0 : i32
    %c0_i32_0 = arith.constant 0 : i32
    %c0_i32_1 = arith.constant 0 : i32
    return %arg0, %c0_i32, %c0_i32_0 : i32, i32, i32
  }
}

</mosaic_0001>

<llo_original>
// kernel: tpu_custom_call.1
$region0: #{tpu_custom_call.1}
  #allocation0 [shape = 'u32[]', space=smem, size = 0x4, offset = 0x4, fixed_abs, tag = 'smem constant byte address 0x4 - core index']
  #allocation1 [shape = 'u32[72,128]{1,0:T(1,128)}', space=vmem, size = 0x9000, scoped, tag = 'internal scratch']
  %s0 = inlined_call_operand.hbm [shape: s32[55,256], index: 0, kind: input, shape index: {}]
  %s1 = inlined_call_operand.vmem [shape: s32[2,55,256], index: 1, kind: output, shape index: {}]
  %s2 = sld [smem:[#allocation0]]
  $region18: #{tpu_custom_call.1} parent=0
    _
  %s4 = ssub.s32 1, %s2
  %s5 = scalar_select 0, %s4, %s2
  $region1: #{tpu_custom_call.1} parent=0
    #allocation2 [shape = 'u8[57344]{0}', space=vmem, size = 0xe000, scoped, tag = 'input window, operand 0, single buffered']
    #allocation3 [shape = 's32[1]{0}', space=sflag, size = 0x4, scoped, tag = 'scoped memory for tpu_custom_call.1']
    %6 = vsyncpa [#allocation3], 0
    // Predicated region
    $region2: #{tpu_custom_call.1} parent=1 // pred_check
      _
    $region3: #{tpu_custom_call.1} parent=1 // pred_check_branch
      %8 = sbr.rel (0) target = $region5
    $region4: #{tpu_custom_call.1} parent=1 // pred_region
      %10 = vsyncadd [#allocation3], 0
      %s11 = sshll.u32 %s0, 4
      %s12 = int_to_ptr.hbm [resolvable:$true] %s11
      %s13 = sshll.u32 [#allocation2], 4
      %s14 = int_to_ptr.vmem [resolvable:$true] %s13
      %19 = dma.hbm_to_vmem [thread:$0]  %s12, 1792, %s14, [#allocation3], 256, 256, 16
    $region5: #{tpu_custom_call.1} parent=1 // pred_fallthru
      _
    // Predicated region
    $region6: #{tpu_custom_call.1} parent=1 // pred_check
      _
    $region7: #{tpu_custom_call.1} parent=1 // pred_check_branch
      %21 = sbr.rel (0) target = $region9
    $region8: #{tpu_custom_call.1} parent=1 // pred_region
      %23 = dma.done [#allocation3], 1792
    $region9: #{tpu_custom_call.1} parent=1 // pred_fallthru
      _
    %v24 = vld [vmem:[#allocation2] sm:$0xff]
    %v25 = vld [vmem:[#allocation2 + $0x8] sm:$0xff]
    %v26 = vld [vmem:[#allocation2 + $0x10] sm:$0xff]
    %v27 = vld [vmem:[#allocation2 + $0x18] sm:$0xff]
    %v28 = vld [vmem:[#allocation2 + $0x20] sm:$0xff]
    %v29 = vld [vmem:[#allocation2 + $0x28] sm:$0xff]
    %v30 = vld [vmem:[#allocation2 + $0x30] sm:$0xff]
    %v31 = vld [vmem:[#allocation2 + $0x38] sm:$0xff]
    %v32 = vld [vmem:[#allocation2 + $0x40] sm:$0xff]
    %v33 = vld [vmem:[#allocation2 + $0x48] sm:$0xff]
    %v34 = vld [vmem:[#allocation2 + $0x50] sm:$0xff]
    %v35 = vld [vmem:[#allocation2 + $0x58] sm:$0xff]
    %v36 = vld [vmem:[#allocation2 + $0x60] sm:$0x7f]
    %v37 = vld [vmem:[#allocation2 + $0x68] sm:$0x7f]
    %38 = vst [vmem:[%s1] sm:$0xff] %v24
    %39 = vst [vmem:[%s1 + $0x8] sm:$0xff] %v25
    %40 = vst [vmem:[%s1 + $0x10] sm:$0xff] %v26
    %41 = vst [vmem:[%s1 + $0x18] sm:$0xff] %v27
    %42 = vst [vmem:[%s1 + $0x20] sm:$0xff] %v28
    %43 = vst [vmem:[%s1 + $0x28] sm:$0xff] %v29
    %44 = vst [vmem:[%s1 + $0x30] sm:$0xff] %v30
    %45 = vst [vmem:[%s1 + $0x38] sm:$0xff] %v31
    %46 = vst [vmem:[%s1 + $0x40] sm:$0xff] %v32
    %47 = vst [vmem:[%s1 + $0x48] sm:$0xff] %v33
    %48 = vst [vmem:[%s1 + $0x50] sm:$0xff] %v34
    %49 = vst [vmem:[%s1 + $0x58] sm:$0xff] %v35
    %50 = vst [vmem:[%s1 + $0x60] sm:$0x7f] %v36
    %51 = vst [vmem:[%s1 + $0x68] sm:$0x7f] %v37
    %s52 = scalar_lea.vmem %s1, 112
    %53 = vst [vmem:[%s52] sm:$0xff] %v24
    %54 = vst [vmem:[%s52 + $0x8] sm:$0xff] %v25
    %55 = vst [vmem:[%s52 + $0x10] sm:$0xff] %v26
    %56 = vst [vmem:[%s52 + $0x18] sm:$0xff] %v27
    %57 = vst [vmem:[%s52 + $0x20] sm:$0xff] %v28
    %58 = vst [vmem:[%s52 + $0x28] sm:$0xff] %v29
    %59 = vst [vmem:[%s52 + $0x30] sm:$0xff] %v30
    %60 = vst [vmem:[%s52 + $0x38] sm:$0xff] %v31
    %61 = vst [vmem:[%s52 + $0x40] sm:$0xff] %v32
    %62 = vst [vmem:[%s52 + $0x48] sm:$0xff] %v33
    %63 = vst [vmem:[%s52 + $0x50] sm:$0xff] %v34
    %64 = vst [vmem:[%s52 + $0x58] sm:$0xff] %v35
    %65 = vst [vmem:[%s52 + $0x60] sm:$0x7f] %v36
    %66 = vst [vmem:[%s52 + $0x68] sm:$0x7f] %v37
    // Predicated region
    $region10: #{tpu_custom_call.1} parent=1 // pred_check
      _
    $region11: #{tpu_custom_call.1} parent=1 // pred_check_branch
      %68 = sbr.rel (0) target = $region13
    $region12: #{tpu_custom_call.1} parent=1 // pred_region
      _
    $region13: #{tpu_custom_call.1} parent=1 // pred_fallthru
      _
    // Predicated region
    $region14: #{tpu_custom_call.1} parent=1 // pred_check
      _
    $region15: #{tpu_custom_call.1} parent=1 // pred_check_branch
      %70 = sbr.rel (0) target = $region17
    $region16: #{tpu_custom_call.1} parent=1 // pred_region
      _
    $region17: #{tpu_custom_call.1} parent=1 // pred_fallthru
      _
    %71 = vsyncpa [#allocation3], 1

</llo_original>
